<compile_context>
chip_gen: v6e
topology: v6e:2x2x1
jax: 0.10.0
libtpu: 0.0.40
codegen_flags: <defaults>
</compile_context>

<pallas_src>
import functools

import jax
import jax.numpy as jnp
from jax.experimental import pallas as pl
from jax.experimental.pallas import tpu as pltpu

LANES = 128                         # vreg lane width: last dim of every block
ACC_ROWS = 32                       # accumulator height (4 vregs)
PIPELINE_BUDGET_BYTES = 16 << 20    # total for 2 inputs x 2 pipeline buffers
VMEM_LIMIT_BYTES = 32 << 20         # explicit scoped-VMEM limit (safe v5e/v6e/v7x)
SMALL_INPUT_ELEMS = 1 << 20         # below this, fused XLA beats kernel launch cost


def _num_tensorcores() -> int:
    """Best-effort TensorCores-per-chip detection (2 on v7x, 1 on v5e/v6e)."""
    try:
        info = pltpu.get_tpu_info()
        for attr in ("num_cores", "num_tensorcores", "tensorcores_per_chip",
                     "num_cores_per_chip", "core_count"):
            val = getattr(info, attr, None)
            if isinstance(val, int) and val >= 1:
                return val
    except Exception:
        pass
    try:
        val = getattr(jax.devices()[0], "num_cores", None)
        if isinstance(val, int) and val >= 1:
            return val
    except Exception:
        pass
    return 1


def _mse_partial_kernel(pred_ref, actual_ref, out_ref, acc_ref, *,
                        rows, tile_rows, steps_per_core):
    """Accumulate per-(sublane, lane) sums of squared differences."""
    c = pl.program_id(0)            # core-parallel axis
    i = pl.program_id(1)            # sequential streaming axis

    @pl.when(i == 0)
    def _():
        acc_ref[...] = jnp.zeros_like(acc_ref)

    # Logical (un-clamped) tile position in the flat (rows, 128) stream.
    step = c * steps_per_core + i
    row_base = step * tile_rows

    diff = pred_ref[...].astype(jnp.float32) - actual_ref[...].astype(jnp.float32)
    sq = diff * diff
    groups = tile_rows // ACC_ROWS

    def accumulate(vals):
        acc_ref[...] += jnp.sum(vals.reshape(groups, ACC_ROWS, LANES), axis=0)

    # Fast path: tile fully in range -> no mask / iota work in the hot loop.
    @pl.when(row_base + tile_rows <= rows)
    def _():
        accumulate(sq)

    # Slow path: only the final partial logical tile and clamped duplicate
    # steps land here.  Row-granularity mask (sub-row tail is in the wrapper).
    @pl.when(row_base + tile_rows > rows)
    def _():
        row_ids = row_base + jax.lax.broadcasted_iota(
            jnp.int32, (tile_rows, LANES), 0)
        accumulate(jnp.where(row_ids < rows, sq, jnp.float32(0.0)))

    @pl.when(i == pl.num_programs(1) - 1)
    def _():
        out_ref[...] = acc_ref[...]


def _sum_sq_diff_pallas(pred2d, actual2d, rows):
    """Sum of (pred - actual)^2 over a (rows, 128) lane-dense slab, in f32."""
    itemsize = max(pred2d.dtype.itemsize, actual2d.dtype.itemsize)
    per_buffer = PIPELINE_BUDGET_BYTES // 4            # 2 inputs x 2 buffers
    max_tile_rows = max(
        ACC_ROWS, (per_buffer // (LANES * itemsize)) // ACC_ROWS * ACC_ROWS)
    needed_rows = -(-rows // ACC_ROWS) * ACC_ROWS
    tile_rows = min(max_tile_rows, needed_rows)

    total_steps = pl.cdiv(rows, tile_rows)
    num_cores = max(1, min(_num_tensorcores(), total_steps))
    steps_per_core = pl.cdiv(total_steps, num_cores)

    def in_map(c, i):
        # Clamp so no DMA ever targets a fully out-of-range block; the in-kernel
        # row mask zeroes contributions from clamped duplicate steps.
        return (jnp.minimum(c * steps_per_core + i, total_steps - 1), 0)

    kernel = functools.partial(
        _mse_partial_kernel, rows=rows, tile_rows=tile_rows,
        steps_per_core=steps_per_core)

    partials = pl.pallas_call(
        kernel,
        out_shape=jax.ShapeDtypeStruct((num_cores * ACC_ROWS, LANES), jnp.float32),
        grid_spec=pltpu.PrefetchScalarGridSpec(
            num_scalar_prefetch=0,
            grid=(num_cores, steps_per_core),
            in_specs=[
                pl.BlockSpec((tile_rows, LANES), in_map),
                pl.BlockSpec((tile_rows, LANES), in_map),
            ],
            out_specs=pl.BlockSpec((ACC_ROWS, LANES), lambda c, i: (c, 0)),
            scratch_shapes=[pltpu.VMEM((ACC_ROWS, LANES), jnp.float32)],
        ),
        compiler_params=pltpu.CompilerParams(
            dimension_semantics=("parallel", "arbitrary"),
            vmem_limit_bytes=VMEM_LIMIT_BYTES,
        ),
    )(pred2d, actual2d)

    # Final cross-lane reduction (tiny, done once).
    return jnp.sum(partials)


def mse_loss_pallas(param_pred, param_actual, *,
                    small_input_elems=SMALL_INPUT_ELEMS):
    """torch.nn.MSELoss (mean reduction) over two same-shaped tensors."""
    assert param_pred.shape == param_actual.shape
    n_elems = param_pred.size
    if n_elems == 0:
        # torch.nn.MSELoss over an empty tensor yields NaN.
        return jnp.float32(jnp.nan)

    if n_elems < small_input_elems:
        # Launch + per-step overhead dominates below ~1M elements; XLA's fused
        # reduction is faster there.
        d = param_pred.astype(jnp.float32) - param_actual.astype(jnp.float32)
        return jnp.mean(d * d)

    pred_flat = jnp.ravel(param_pred)
    actual_flat = jnp.ravel(param_actual)

    rows = n_elems // LANES
    main = rows * LANES

    total = jnp.float32(0.0)
    if rows > 0:
        pred2d = pred_flat[:main].reshape(rows, LANES)
        actual2d = actual_flat[:main].reshape(rows, LANES)
        total = total + _sum_sq_diff_pallas(pred2d, actual2d, rows)

    if main < n_elems:
        # <128-element ragged tail: tiny plain-JAX sum (no full-array pad copy).
        tp = pred_flat[main:].astype(jnp.float32)
        ta = actual_flat[main:].astype(jnp.float32)
        total = total + jnp.sum((tp - ta) ** 2)

    return total / jnp.float32(n_elems)


if __name__ == "__main__":
    key = jax.random.PRNGKey(0)
    k1, k2 = jax.random.split(key)

    # Small NCHW-shaped "parameter prediction" tensors (B=2, C=4, H=16, W=16).
    shape = (2, 4, 16, 16)
    param_pred = jax.random.normal(k1, shape, dtype=jnp.float32)
    param_actual = jax.random.normal(k2, shape, dtype=jnp.float32)

    # Force the Pallas path at this small size so the kernel itself runs once.
    loss = mse_loss_pallas(param_pred, param_actual, small_input_elems=0)
    jax.block_until_ready(loss)
    ref = jnp.mean((param_pred - param_actual) ** 2)
    assert jnp.allclose(loss, ref, rtol=1e-6, atol=1e-6), (loss, ref)

    # Default path (small-input XLA fast path) must match too.
    loss_fast = mse_loss_pallas(param_pred, param_actual)
    assert jnp.allclose(loss_fast, ref, rtol=1e-6, atol=1e-6), (loss_fast, ref)

    # Ragged (not a multiple of 128) bf16 case: kernel + plain-JAX tail.
    shape2 = (3, 5, 7, 11)   # 1155 elements -> 9 full rows + 3-element tail
    p2 = jax.random.normal(k1, shape2, dtype=jnp.bfloat16)
    a2 = jax.random.normal(k2, shape2, dtype=jnp.bfloat16)
    loss2 = mse_loss_pallas(p2, a2, small_input_elems=0)
    ref2 = jnp.mean((p2.astype(jnp.float32) - a2.astype(jnp.float32)) ** 2)
    assert jnp.allclose(loss2, ref2, rtol=1e-5, atol=1e-6), (loss2, ref2)

    # Larger case (>1M elems) exercising multi-step streaming: fast path on
    # full tiles plus the masked final partial tile.
    shape3 = (513, 2048)
    p3 = jax.random.normal(k1, shape3, dtype=jnp.float32)
    a3 = jax.random.normal(k2, shape3, dtype=jnp.float32)
    loss3 = mse_loss_pallas(p3, a3)
    jax.block_until_ready(loss3)
    ref3 = jnp.mean((p3 - a3) ** 2)
    assert jnp.allclose(loss3, ref3, rtol=1e-4, atol=1e-6), (loss3, ref3)

    print("KERNEL_OK")
</pallas_src>

<mosaic_0001>
module attributes {stable_mosaic.version = 11 : i64} {
  func.func @_mse_partial_kernel(%arg0: i32, %arg1: i32, %arg2: memref<32x128xf32, #tpu.memory_space<vmem>>, %arg3: memref<32x128xf32, #tpu.memory_space<vmem>>, %arg4: memref<32x128xf32, #tpu.memory_space<vmem>>, %arg5: memref<32x128xf32, #tpu.memory_space<vmem>>) attributes {dimension_semantics = [#tpu.dimension_semantics<parallel>, #tpu.dimension_semantics<arbitrary>], iteration_bounds = array<i64: 1, 1>, scalar_prefetch = 0 : i64, scratch_operands = 1 : i64, tpu.core_type = #tpu.core_type<tc>, window_params = [{transform_indices = @transform_0, window_bounds = array<i64: 32, 128>}, {transform_indices = @transform_1, window_bounds = array<i64: 32, 128>}, {transform_indices = @transform_2, window_bounds = array<i64: 32, 128>}]} {
    %c0_i32 = arith.constant 0 : i32
    %0 = arith.cmpi eq, %arg1, %c0_i32 : i32
    %1 = arith.extui %0 : i1 to i32
    %c0_i32_0 = arith.constant 0 : i32
    %2 = arith.cmpi ne, %1, %c0_i32_0 : i32
    scf.if %2 {
      %cst = arith.constant 0.000000e+00 : f32
      %21 = vector.broadcast %cst : f32 to vector<32x128xf32>
      %c0_11 = arith.constant 0 : index
      %c0_12 = arith.constant 0 : index
      %22 = vector.load %arg5[%c0_11, %c0_12] : memref<32x128xf32, #tpu.memory_space<vmem>>, vector<32x128xf32>
      tpu.vector_store %arg5[%c0_11, %c0_12], %21 {strides = array<i32>} : memref<32x128xf32, #tpu.memory_space<vmem>>, vector<32x128xf32>,
    } else {
    }
    %c1_i32 = arith.constant 1 : i32
    %3 = arith.muli %arg0, %c1_i32 : i32
    %4 = arith.addi %3, %arg1 : i32
    %c32_i32 = arith.constant 32 : i32
    %5 = arith.muli %4, %c32_i32 : i32
    %c0 = arith.constant 0 : index
    %c0_1 = arith.constant 0 : index
    %6 = vector.load %arg2[%c0, %c0_1] : memref<32x128xf32, #tpu.memory_space<vmem>>, vector<32x128xf32>
    %c0_2 = arith.constant 0 : index
    %c0_3 = arith.constant 0 : index
    %7 = vector.load %arg3[%c0_2, %c0_3] : memref<32x128xf32, #tpu.memory_space<vmem>>, vector<32x128xf32>
    %8 = arith.subf %6, %7 : vector<32x128xf32>
    %9 = arith.mulf %8, %8 : vector<32x128xf32>
    %c32_i32_4 = arith.constant 32 : i32
    %10 = arith.addi %5, %c32_i32_4 : i32
    %c16_i32 = arith.constant 16 : i32
    %11 = arith.cmpi sle, %10, %c16_i32 : i32
    %12 = arith.extui %11 : i1 to i32
    %c0_i32_5 = arith.constant 0 : i32
    %13 = arith.cmpi ne, %12, %c0_i32_5 : i32
    scf.if %13 {
      %c0_11 = arith.constant 0 : index
      %c0_12 = arith.constant 0 : index
      %21 = vector.load %arg5[%c0_11, %c0_12] : memref<32x128xf32, #tpu.memory_space<vmem>>, vector<32x128xf32>
      %22 = vector.shape_cast %9 : vector<32x128xf32> to vector<1x32x128xf32>
      %cst = arith.constant dense<0.000000e+00> : vector<32x128xf32>
      %23 = vector.multi_reduction <add>, %22, %cst [0] : vector<1x32x128xf32> to vector<32x128xf32>
      %24 = arith.addf %21, %23 : vector<32x128xf32>
      %c0_13 = arith.constant 0 : index
      %c0_14 = arith.constant 0 : index
      %25 = vector.load %arg5[%c0_13, %c0_14] : memref<32x128xf32, #tpu.memory_space<vmem>>, vector<32x128xf32>
      tpu.vector_store %arg5[%c0_13, %c0_14], %24 {strides = array<i32>} : memref<32x128xf32, #tpu.memory_space<vmem>>, vector<32x128xf32>,
    } else {
    }
    %c32_i32_6 = arith.constant 32 : i32
    %14 = arith.addi %5, %c32_i32_6 : i32
    %c16_i32_7 = arith.constant 16 : i32
    %15 = arith.cmpi sgt, %14, %c16_i32_7 : i32
    %16 = arith.extui %15 : i1 to i32
    %c0_i32_8 = arith.constant 0 : i32
    %17 = arith.cmpi ne, %16, %c0_i32_8 : i32
    scf.if %17 {
      %21 = tpu.iota {dimensions = array<i32: 0>} : vector<32x128xi32>
      %22 = vector.broadcast %5 : i32 to vector<32x128xi32>
      %23 = arith.addi %22, %21 : vector<32x128xi32>
      %c16_i32_11 = arith.constant 16 : i32
      %24 = vector.broadcast %c16_i32_11 : i32 to vector<32x128xi32>
      %25 = arith.cmpi slt, %23, %24 : vector<32x128xi32>
      %cst = arith.constant 0.000000e+00 : f32
      %26 = vector.broadcast %cst : f32 to vector<32x128xf32>
      %27 = arith.select %25, %9, %26 : vector<32x128xi1>, vector<32x128xf32>
      %c0_12 = arith.constant 0 : index
      %c0_13 = arith.constant 0 : index
      %28 = vector.load %arg5[%c0_12, %c0_13] : memref<32x128xf32, #tpu.memory_space<vmem>>, vector<32x128xf32>
      %29 = vector.shape_cast %27 : vector<32x128xf32> to vector<1x32x128xf32>
      %cst_14 = arith.constant dense<0.000000e+00> : vector<32x128xf32>
      %30 = vector.multi_reduction <add>, %29, %cst_14 [0] : vector<1x32x128xf32> to vector<32x128xf32>
      %31 = arith.addf %28, %30 : vector<32x128xf32>
      %c0_15 = arith.constant 0 : index
      %c0_16 = arith.constant 0 : index
      %32 = vector.load %arg5[%c0_15, %c0_16] : memref<32x128xf32, #tpu.memory_space<vmem>>, vector<32x128xf32>
      tpu.vector_store %arg5[%c0_15, %c0_16], %31 {strides = array<i32>} : memref<32x128xf32, #tpu.memory_space<vmem>>, vector<32x128xf32>,
    } else {
    }
    %c0_i32_9 = arith.constant 0 : i32
    %18 = arith.cmpi eq, %arg1, %c0_i32_9 : i32
    %19 = arith.extui %18 : i1 to i32
    %c0_i32_10 = arith.constant 0 : i32
    %20 = arith.cmpi ne, %19, %c0_i32_10 : i32
    scf.if %20 {
      %c0_11 = arith.constant 0 : index
      %c0_12 = arith.constant 0 : index
      %21 = vector.load %arg5[%c0_11, %c0_12] : memref<32x128xf32, #tpu.memory_space<vmem>>, vector<32x128xf32>
      %c0_13 = arith.constant 0 : index
      %c0_14 = arith.constant 0 : index
      %22 = vector.load %arg4[%c0_13, %c0_14] : memref<32x128xf32, #tpu.memory_space<vmem>>, vector<32x128xf32>
      tpu.vector_store %arg4[%c0_13, %c0_14], %21 {strides = array<i32>} : memref<32x128xf32, #tpu.memory_space<vmem>>, vector<32x128xf32>,
    } else {
    }
    return
  }
  func.func @transform_0(%arg0: i32, %arg1: i32) -> (i32, i32) {
    %c1_i32 = arith.constant 1 : i32
    %0 = arith.muli %arg0, %c1_i32 : i32
    %1 = arith.addi %0, %arg1 : i32
    %c0_i32 = arith.constant 0 : i32
    %2 = arith.minsi %1, %c0_i32 : i32
    %c0_i32_0 = arith.constant 0 : i32
    %c0_i32_1 = arith.constant 0 : i32
    return %2, %c0_i32_0 : i32, i32
  }
  func.func @transform_1(%arg0: i32, %arg1: i32) -> (i32, i32) {
    %c1_i32 = arith.constant 1 : i32
    %0 = arith.muli %arg0, %c1_i32 : i32
    %1 = arith.addi %0, %arg1 : i32
    %c0_i32 = arith.constant 0 : i32
    %2 = arith.minsi %1, %c0_i32 : i32
    %c0_i32_0 = arith.constant 0 : i32
    %c0_i32_1 = arith.constant 0 : i32
    return %2, %c0_i32_0 : i32, i32
  }
  func.func @transform_2(%arg0: i32, %arg1: i32) -> (i32, i32) {
    %c0_i32 = arith.constant 0 : i32
    %c0_i32_0 = arith.constant 0 : i32
    return %arg0, %c0_i32 : i32, i32
  }
}

</mosaic_0001>

<llo_original>
// kernel: tpu_custom_call.1
$region0: #{tpu_custom_call.1}
  #allocation0 [shape = 'u32[]', space=smem, size = 0x4, offset = 0x4, fixed_abs, tag = 'smem constant byte address 0x4 - core index']
  #allocation1 [shape = 'u32[144,128]{1,0:T(1,128)}', space=vmem, size = 0x12000, scoped, tag = 'internal scratch']
  #allocation2 [shape = 'f32[32,128]{1,0:T(8,128)}', space=vmem, size = 0x4000, scoped, tag = 'scratch operand']
  %s0 = inlined_call_operand.hbm [shape: f32[16,128], index: 0, kind: input, shape index: {}]
  %s1 = inlined_call_operand.hbm [shape: f32[16,128], index: 1, kind: input, shape index: {}]
  %s2 = inlined_call_operand.hbm [shape: f32[32,128], index: 2, kind: output, shape index: {}]
  %s3 = sld [smem:[#allocation0]]
  $region42: #{tpu_custom_call.1} parent=0
    _
  %s5 = ssub.s32 1, %s3
  %s6 = scalar_select 0, %s5, %s3
  $region1: #{tpu_custom_call.1} parent=0
    #allocation3 [shape = 'u8[16384]{0}', space=vmem, size = 0x4000, scoped, tag = 'input window, operand 0, single buffered']
    #allocation4 [shape = 's32[1]{0}', space=sflag, size = 0x4, scoped, tag = 'scoped memory for tpu_custom_call.1']
    #allocation5 [shape = 's32[1]{0}', space=sflag, size = 0x4, scoped, tag = 'scoped memory for tpu_custom_call.1']
    #allocation6 [shape = 'u8[16384]{0}', space=vmem, size = 0x4000, scoped, tag = 'input window, operand 1, single buffered']
    #allocation7 [shape = 's32[1]{0}', space=sflag, size = 0x4, scoped, tag = 'scoped memory for tpu_custom_call.1']
    #allocation8 [shape = 'u8[16384]{0}', space=vmem, size = 0x4000, scoped, tag = 'output window, operand 0, single buffered']
    %7 = vsyncpa [#allocation4], 0
    %8 = vsyncpa [#allocation7], 0
    %9 = vsyncpa [#allocation5], 0
    // Predicated region
    $region2: #{tpu_custom_call.1} parent=1 // pred_check
      _
    $region3: #{tpu_custom_call.1} parent=1 // pred_check_branch
      %11 = sbr.rel (0) target = $region5
    $region4: #{tpu_custom_call.1} parent=1 // pred_region
      %s12 = sadd.s32 0, 0
      %p13 = scmp.lt.s32.totalorder %s12, 0
      %s14 = scalar_select %p13, %s12, 0
      %s15 = smul.u32 4, %s14
      %s16 = ssub.s32 2, %s15
      %s17 = smul.u32 128, %s16
      %s19 = ssub.s32 512, %s17
      %20 = vsyncadd [#allocation4], %s19
      %p21 = scmp.ne.s32.totalorder 0, %s17
      %s22 = smul.addr %s15, 128
      %s23 = scalar_lea.hbm %s0, %s22
      %s24 = smul.u32 8, %s16
      %s25 = sshll.u32 [#allocation3], 4
      %s26 = int_to_ptr.vmem [resolvable:$true] %s25
      %s27 = sshll.u32 %s24, 4
      %31 = dma.hbm_to_vmem [thread:$0]  (%p21), %s23, %s27, %s26, [#allocation4], 128, 128, 8
    $region5: #{tpu_custom_call.1} parent=1 // pred_fallthru
      _
    // Predicated region
    $region6: #{tpu_custom_call.1} parent=1 // pred_check
      _
    $region7: #{tpu_custom_call.1} parent=1 // pred_check_branch
      %33 = sbr.rel (0) target = $region9
    $region8: #{tpu_custom_call.1} parent=1 // pred_region
      %s34 = sadd.s32 0, 0
      %p35 = scmp.lt.s32.totalorder %s34, 0
      %s36 = scalar_select %p35, %s34, 0
      %s37 = smul.u32 4, %s36
      %s38 = ssub.s32 2, %s37
      %s39 = smul.u32 128, %s38
      %s41 = ssub.s32 512, %s39
      %42 = vsyncadd [#allocation7], %s41
      %p43 = scmp.ne.s32.totalorder 0, %s39
      %s44 = smul.addr %s37, 128
      %s45 = scalar_lea.hbm %s1, %s44
      %s46 = smul.u32 8, %s38
      %s47 = sshll.u32 [#allocation6], 4
      %s48 = int_to_ptr.vmem [resolvable:$true] %s47
      %s49 = sshll.u32 %s46, 4
      %53 = dma.hbm_to_vmem [thread:$0]  (%p43), %s45, %s49, %s48, [#allocation7], 128, 128, 8
    $region9: #{tpu_custom_call.1} parent=1 // pred_fallthru
      _
    // Predicated region
    $region10: #{tpu_custom_call.1} parent=1 // pred_check
      _
    $region11: #{tpu_custom_call.1} parent=1 // pred_check_branch
      %55 = sbr.rel (0) target = $region13
    $region12: #{tpu_custom_call.1} parent=1 // pred_region
      %56 = dma.done [#allocation4], 512
    $region13: #{tpu_custom_call.1} parent=1 // pred_fallthru
      _
    // Predicated region
    $region14: #{tpu_custom_call.1} parent=1 // pred_check
      _
    $region15: #{tpu_custom_call.1} parent=1 // pred_check_branch
      %58 = sbr.rel (0) target = $region17
    $region16: #{tpu_custom_call.1} parent=1 // pred_region
      %59 = dma.done [#allocation7], 512
    $region17: #{tpu_custom_call.1} parent=1 // pred_fallthru
      _
    %s60 = sadd.s32 0, 0
    %p61 = scmp.lt.s32.totalorder %s60, 0
    %s62 = scalar_select %p61, %s60, 0
    %s63 = smul.u32 4, %s62
    %s64 = ssub.s32 2, %s63
    %s65 = smul.u32 128, %s64
    %s66 = sadd.s32 0, 0
    %p67 = scmp.lt.s32.totalorder %s66, 0
    %s68 = scalar_select %p67, %s66, 0
    %s69 = smul.u32 4, %s68
    %s70 = ssub.s32 2, %s69
    %s71 = smul.u32 128, %s70
    %p72 = scmp.eq.s32.totalorder 0, 0
    // Predicated region
    $region18: #{tpu_custom_call.1} parent=1 // pred_check
      %p73 = pneg %p72
    $region19: #{tpu_custom_call.1} parent=1 // pred_check_branch
      %75 = sbr.rel (%p73) target = $region21
    $region20: #{tpu_custom_call.1} parent=1 // pred_region
      %76 = vst [vmem:[#allocation2] sm:$0xff] 0.0
      %77 = vst [vmem:[#allocation2 + $0x8] sm:$0xff] 0.0
      %78 = vst [vmem:[#allocation2 + $0x10] sm:$0xff] 0.0
      %79 = vst [vmem:[#allocation2 + $0x18] sm:$0xff] 0.0
    $region21: #{tpu_custom_call.1} parent=1 // pred_fallthru
      _
    %s80 = sadd.s32 0, 0
    %s81 = smul.u32 %s80, 32
    %v82 = vld [vmem:[#allocation3] sm:$0xff]
    %v83 = vld [vmem:[#allocation3 + $0x8] sm:$0xff]
    %v84 = vld [vmem:[#allocation3 + $0x10] sm:$0xff]
    %v85 = vld [vmem:[#allocation3 + $0x18] sm:$0xff]
    %v86 = vld [vmem:[#allocation6] sm:$0xff]
    %v87 = vld [vmem:[#allocation6 + $0x8] sm:$0xff]
    %v88 = vld [vmem:[#allocation6 + $0x10] sm:$0xff]
    %v89 = vld [vmem:[#allocation6 + $0x18] sm:$0xff]
    %v90 = vsub.f32 %v82, %v86
    %v91 = vsub.f32 %v83, %v87
    %v92 = vsub.f32 %v84, %v88
    %v93 = vsub.f32 %v85, %v89
    %v94 = vmul.f32 %v90, %v90
    %v95 = vmul.f32 %v91, %v91
    %v96 = vmul.f32 %v92, %v92
    %v97 = vmul.f32 %v93, %v93
    %s98 = sadd.s32 %s81, 32
    %p99 = scmp.le.s32.totalorder %s98, 16
    // Predicated region
    $region22: #{tpu_custom_call.1} parent=1 // pred_check
      %p100 = pneg %p99
    $region23: #{tpu_custom_call.1} parent=1 // pred_check_branch
      %102 = sbr.rel (%p100) target = $region25
    $region24: #{tpu_custom_call.1} parent=1 // pred_region
      %v103 = vld [vmem:[#allocation2] sm:$0xff]
      %v104 = vld [vmem:[#allocation2 + $0x8] sm:$0xff]
      %v105 = vld [vmem:[#allocation2 + $0x10] sm:$0xff]
      %v106 = vld [vmem:[#allocation2 + $0x18] sm:$0xff]
      %v107 = vadd.f32 %v94, 0.0
      %v108 = vadd.f32 %v95, 0.0
      %v109 = vadd.f32 %v96, 0.0
      %v110 = vadd.f32 %v97, 0.0
      %v111 = vadd.f32 %v103, %v107
      %v112 = vadd.f32 %v104, %v108
      %v113 = vadd.f32 %v105, %v109
      %v114 = vadd.f32 %v106, %v110
      %115 = vst [vmem:[#allocation2] sm:$0xff] %v111
      %116 = vst [vmem:[#allocation2 + $0x8] sm:$0xff] %v112
      %117 = vst [vmem:[#allocation2 + $0x10] sm:$0xff] %v113
      %118 = vst [vmem:[#allocation2 + $0x18] sm:$0xff] %v114
    $region25: #{tpu_custom_call.1} parent=1 // pred_fallthru
      _
    %p119 = scmp.gt.s32.totalorder %s98, 16
    // Predicated region
    $region26: #{tpu_custom_call.1} parent=1 // pred_check
      %p120 = pneg %p119
    $region27: #{tpu_custom_call.1} parent=1 // pred_check_branch
      %122 = sbr.rel (%p120) target = $region29
    $region28: #{tpu_custom_call.1} parent=1 // pred_region
      %v123 = vlaneseq
      %v124 = vshrl.u32 %v123, 7
      %v125 = vadd.s32 %v124, 8
      %v126 = vadd.s32 %v124, 16
      %v127 = vadd.s32 %v124, 24
      %v128 = vstv %s81
      %v129 = vadd.s32 %v128, %v124
      %v130 = vadd.s32 %v128, %v125
      %v131 = vadd.s32 %v128, %v126
      %v132 = vadd.s32 %v128, %v127
      %vm133 = vcmp.lt.s32.totalorder %v129, 16
      %vm134 = vcmp.lt.s32.totalorder %v130, 16
      %vm135 = vcmp.lt.s32.totalorder %v131, 16
      %vm136 = vcmp.lt.s32.totalorder %v132, 16
      %v137 = vsel %vm133, %v94, 0.0
      %v138 = vsel %vm134, %v95, 0.0
      %v139 = vsel %vm135, %v96, 0.0
      %v140 = vsel %vm136, %v97, 0.0
      %v141 = vld [vmem:[#allocation2] sm:$0xff]
      %v142 = vld [vmem:[#allocation2 + $0x8] sm:$0xff]
      %v143 = vld [vmem:[#allocation2 + $0x10] sm:$0xff]
      %v144 = vld [vmem:[#allocation2 + $0x18] sm:$0xff]
      %v145 = vadd.f32 %v137, 0.0
      %v146 = vadd.f32 %v138, 0.0
      %v147 = vadd.f32 %v139, 0.0
      %v148 = vadd.f32 %v140, 0.0
      %v149 = vadd.f32 %v141, %v145
      %v150 = vadd.f32 %v142, %v146
      %v151 = vadd.f32 %v143, %v147
      %v152 = vadd.f32 %v144, %v148
      %153 = vst [vmem:[#allocation2] sm:$0xff] %v149
      %154 = vst [vmem:[#allocation2 + $0x8] sm:$0xff] %v150
      %155 = vst [vmem:[#allocation2 + $0x10] sm:$0xff] %v151
      %156 = vst [vmem:[#allocation2 + $0x18] sm:$0xff] %v152
    $region29: #{tpu_custom_call.1} parent=1 // pred_fallthru
      _
    // Predicated region
    $region30: #{tpu_custom_call.1} parent=1 // pred_check
      %p157 = pneg %p72
    $region31: #{tpu_custom_call.1} parent=1 // pred_check_branch
      %159 = sbr.rel (%p157) target = $region33
    $region32: #{tpu_custom_call.1} parent=1 // pred_region
      %v160 = vld [vmem:[#allocation2] sm:$0xff]
      %v161 = vld [vmem:[#allocation2 + $0x8] sm:$0xff]
      %v162 = vld [vmem:[#allocation2 + $0x10] sm:$0xff]
      %v163 = vld [vmem:[#allocation2 + $0x18] sm:$0xff]
      %164 = vst [vmem:[#allocation8] sm:$0xff] %v160
      %165 = vst [vmem:[#allocation8 + $0x8] sm:$0xff] %v161
      %166 = vst [vmem:[#allocation8 + $0x10] sm:$0xff] %v162
      %167 = vst [vmem:[#allocation8 + $0x18] sm:$0xff] %v163
    $region33: #{tpu_custom_call.1} parent=1 // pred_fallthru
      _
    // Predicated region
    $region34: #{tpu_custom_call.1} parent=1 // pred_check
      _
    $region35: #{tpu_custom_call.1} parent=1 // pred_check_branch
      %169 = sbr.rel (0) target = $region37
    $region36: #{tpu_custom_call.1} parent=1 // pred_region
      %s171 = ssub.s32 512, 512
      %172 = vsyncadd [#allocation5], %s171
      %s173 = sshll.u32 [#allocation8], 4
      %s174 = int_to_ptr.vmem [resolvable:$true] %s173
      %179 = dma.vmem_to_hbm [thread:$0]  %s174, 512, %s2, [#allocation5], 128, 128, 8
    $region37: #{tpu_custom_call.1} parent=1 // pred_fallthru
      _
    // Predicated region
    $region38: #{tpu_custom_call.1} parent=1 // pred_check
      _
    $region39: #{tpu_custom_call.1} parent=1 // pred_check_branch
      %181 = sbr.rel (0) target = $region41
    $region40: #{tpu_custom_call.1} parent=1 // pred_region
      %182 = dma.done [#allocation5], 512
    $region41: #{tpu_custom_call.1} parent=1 // pred_fallthru
      _
    %183 = vsyncpa [#allocation4], 1
    %184 = vsyncpa [#allocation7], 1
    %185 = vsyncpa [#allocation5], 1

</llo_original>
